<compile_context>
chip_gen: v5e
topology: v5e:2x2
jax: 0.10.0
libtpu: 0.0.40
codegen_flags: <defaults>
</compile_context>

<pallas_src>
import functools

import jax
import jax.numpy as jnp
from jax.experimental import pallas as pl
from jax.experimental.pallas import tpu as pltpu

_MIB = 1024 * 1024


def _round_up(v, m):
    return (v + m - 1) // m * m


def _vmem_capacity_bytes():
    try:
        return int(pltpu.get_tpu_info().vmem_capacity_bytes)
    except Exception:
        return 64 * _MIB          # conservative fallback (v7x per-TC VMEM)


# ---------------------------------------------------------------------------
# Kernels
# ---------------------------------------------------------------------------
def _fused_kernel(x_ref, w_ref, o_ref, *, c, inv_hw):
    """Single pass: mean -> CxC FC -> relu -> sigmoid -> scale for (bt, C, HW)."""
    xf = x_ref[...].astype(jnp.float32)                     # (bt, C, HW)
    m = jnp.sum(xf, axis=-1, keepdims=True) * inv_hw        # (bt, C, 1) f32
    # Tiny CxC (C=3) FC unrolled on the VPU with SMEM scalar weights; pushing
    # 9 MACs through the MXU would be pure fill/drain latency.
    for i in range(c):
        z = m[:, 0, :] * w_ref[i, 0]
        for j in range(1, c):
            z = z + m[:, j, :] * w_ref[i, j]
        g = jax.nn.sigmoid(jnp.maximum(z, 0.0))             # (bt, 1)
        o_ref[:, i, :] = (xf[:, i, :] * g).astype(o_ref.dtype)


def _pool_kernel(x_ref, s_ref, *, hw, hw_tile, need_mask):
    """Pass 1 (tiled): per-row sums over lane tiles, accumulated in f32."""
    j = pl.program_id(1)

    @pl.when(j == 0)
    def _():
        s_ref[...] = jnp.zeros(s_ref.shape, s_ref.dtype)

    x = x_ref[...].astype(jnp.float32)                      # (bc_tile, hw_tile)
    if need_mask:                                           # ragged last tile
        lane = jax.lax.broadcasted_iota(jnp.int32, x.shape, 1) + j * hw_tile
        x = jnp.where(lane < hw, x, 0.0)
    s_ref[...] += jnp.sum(x, axis=-1, keepdims=True)


def _scale_kernel(x_ref, g_ref, o_ref):
    """Pass 2 (tiled): broadcast the per-row gate across the lanes."""
    o_ref[...] = (x_ref[...].astype(jnp.float32) * g_ref[...]).astype(o_ref.dtype)


# ---------------------------------------------------------------------------
# Forward wrapper
# ---------------------------------------------------------------------------
def channel_weight_forward(x, w, *, force_two_pass=False, hw_tile=None, bc_tile=None):
    """ChannelWeightLayer forward.  x: (B, C, H, W); w: (C, C) nn.Linear weight."""
    b, c, h, wd = x.shape
    assert w.shape == (c, c)
    hw = h * wd
    bc = b * c
    inv_hw = 1.0 / float(hw)
    out_dtype = x.dtype
    itemsize = jnp.dtype(x.dtype).itemsize
    w32 = w.astype(jnp.float32)

    vmem_cap = _vmem_capacity_bytes()
    vmem_limit = min(vmem_cap * 3 // 4, 127 * _MIB)
    cpad = _round_up(c, 8)

    # ----------------------- fused single-pass path ------------------------
    # Per batch row: in + out blocks double-buffered in native dtype plus the
    # in-kernel f32 temporaries (conservative estimate).
    per_row_bytes = cpad * hw * (4 * itemsize + 8)
    fused_budget = vmem_cap // 2
    use_fused = (not force_two_pass) and per_row_bytes <= fused_budget
    # TODO(synk): on v7x with B == 1 and large HW the fused grid has no parallel
    # extent for the second TensorCore; an HW-split fused variant would recover it.

    if use_fused:
        bt = min(b, max(1, fused_budget // per_row_bytes))
        xf = x.reshape(b, c, hw)
        out = pl.pallas_call(
            functools.partial(_fused_kernel, c=c, inv_hw=inv_hw),
            out_shape=jax.ShapeDtypeStruct((b, c, hw), out_dtype),
            grid=(pl.cdiv(b, bt),),
            in_specs=[pl.BlockSpec((bt, c, hw), lambda i: (i, 0, 0)),
                      pl.BlockSpec(memory_space=pltpu.MemorySpace.SMEM)],
            out_specs=pl.BlockSpec((bt, c, hw), lambda i: (i, 0, 0)),
            compiler_params=pltpu.CompilerParams(
                dimension_semantics=("parallel",),
                vmem_limit_bytes=vmem_limit),
            cost_estimate=pl.CostEstimate(
                flops=2 * b * c * hw, transcendentals=b * c,
                bytes_accessed=2 * b * c * hw * itemsize),
        )(xf, w32)
        return out.reshape(b, c, h, wd)

    # --------------------------- two-pass path -----------------------------
    # Flat (B*C, HW): sublane-dense blocks, no 8/3 vreg padding waste.
    xf = x.reshape(bc, hw)

    if bc_tile is None:
        bc_tile = bc if bc <= 512 else 512
    bc_tile = min(bc_tile, bc)
    bc_pad = _round_up(bc_tile, 8)

    if hw_tile is None:
        tile_budget = int(vmem_cap * 0.4)
        hw_tile = tile_budget // (bc_pad * (4 * itemsize + 4))
        hw_tile = min(hw_tile, 128 * 1024)
    hw_tile = min(hw_tile, _round_up(hw, 128))
    hw_tile = max(128, (hw_tile // 128) * 128)

    n_bc = pl.cdiv(bc, bc_tile)
    n_hw = pl.cdiv(hw, hw_tile)
    need_mask = (hw % hw_tile) != 0

    sums = pl.pallas_call(
        functools.partial(_pool_kernel, hw=hw, hw_tile=hw_tile, need_mask=need_mask),
        out_shape=jax.ShapeDtypeStruct((bc, 1), jnp.float32),
        grid=(n_bc, n_hw),
        in_specs=[pl.BlockSpec((bc_tile, hw_tile), lambda i, j: (i, j))],
        out_specs=pl.BlockSpec((bc_tile, 1), lambda i, j: (i, 0)),
        compiler_params=pltpu.CompilerParams(
            dimension_semantics=("parallel", "arbitrary"),
            vmem_limit_bytes=vmem_limit),
        cost_estimate=pl.CostEstimate(
            flops=bc * hw, transcendentals=0,
            bytes_accessed=bc * hw * itemsize + bc * 4),
    )(xf)

    # The CxC FC + relu + sigmoid on the pooled means is ~9 FLOPs/row: plain JAX.
    means = sums.reshape(b, c) * inv_hw
    gate = jax.nn.sigmoid(jnp.maximum(means @ w32.T, 0.0)).reshape(bc, 1)

    out = pl.pallas_call(
        _scale_kernel,
        out_shape=jax.ShapeDtypeStruct((bc, hw), out_dtype),
        grid=(n_bc, n_hw),
        in_specs=[pl.BlockSpec((bc_tile, hw_tile), lambda i, j: (i, j)),
                  pl.BlockSpec((bc_tile, 1), lambda i, j: (i, 0))],
        out_specs=pl.BlockSpec((bc_tile, hw_tile), lambda i, j: (i, j)),
        compiler_params=pltpu.CompilerParams(
            dimension_semantics=("parallel", "parallel"),
            vmem_limit_bytes=vmem_limit),
        cost_estimate=pl.CostEstimate(
            flops=bc * hw, transcendentals=0,
            bytes_accessed=2 * bc * hw * itemsize + bc * 4),
    )(xf, gate)

    return out.reshape(b, c, h, wd)


# ---------------------------------------------------------------------------
# Reference + test
# ---------------------------------------------------------------------------
def _reference(x, w):
    xf = x.astype(jnp.float32)
    y = jnp.mean(xf, axis=(2, 3))                    # AdaptiveAvgPool2d(1).view(b, c)
    y = y @ w.astype(jnp.float32).T                  # Linear(3, 3, bias=False)
    y = jax.nn.sigmoid(jnp.maximum(y, 0.0))          # ReLU -> Sigmoid
    return xf * y[:, :, None, None]                  # expand_as multiply


if __name__ == "__main__":
    key = jax.random.PRNGKey(0)
    kx, kw, kx2 = jax.random.split(key, 3)

    # Channels = 3 is hard-wired by the module's nn.Linear(3, 3, bias=False).
    x = jax.random.normal(kx, (2, 3, 16, 16), jnp.float32)
    w = 0.5 * jax.random.normal(kw, (3, 3), jnp.float32)
    x2 = jax.random.normal(kx2, (2, 3, 20, 20), jnp.float32)   # ragged HW (400)

    fwd = jax.jit(channel_weight_forward,
                  static_argnames=("force_two_pass", "hw_tile", "bc_tile"))

    out_fused = fwd(x, w)                                      # fused single-pass
    out_two = fwd(x2, w, force_two_pass=True, hw_tile=128)     # tiled + ragged lane mask
    out_bf16 = fwd(x.astype(jnp.bfloat16), w)                  # native-dtype fused path
    jax.block_until_ready((out_fused, out_two, out_bf16))

    assert out_fused.dtype == jnp.float32
    assert out_bf16.dtype == jnp.bfloat16
    assert jnp.allclose(out_fused, _reference(x, w), atol=1e-5, rtol=1e-5)
    assert jnp.allclose(out_two, _reference(x2, w), atol=1e-5, rtol=1e-5)
    assert jnp.allclose(out_bf16.astype(jnp.float32),
                        _reference(x.astype(jnp.bfloat16), w),
                        atol=2e-2, rtol=2e-2)
    print("KERNEL_OK")
</pallas_src>

<mosaic_0001>
module attributes {stable_mosaic.version = 11 : i64} {
  func.func @_fused_kernel(%arg0: i32, %arg1: memref<2x3x256xf32, #tpu.memory_space<vmem>>, %arg2: memref<3x3xf32, #tpu.memory_space<smem>>, %arg3: memref<2x3x256xf32, #tpu.memory_space<vmem>>) attributes {dimension_semantics = [#tpu.dimension_semantics<parallel>], iteration_bounds = array<i64: 1>, scalar_prefetch = 0 : i64, scratch_operands = 0 : i64, tpu.core_type = #tpu.core_type<tc>, window_params = [{transform_indices = @transform_0, window_bounds = array<i64: 2, 3, 256>}, {transform_indices = @transform_1, window_bounds = array<i64: 3, 3>}, {transform_indices = @transform_2, window_bounds = array<i64: 2, 3, 256>}]} {
    %c0 = arith.constant 0 : index
    %c0_0 = arith.constant 0 : index
    %c0_1 = arith.constant 0 : index
    %0 = vector.load %arg1[%c0, %c0_0, %c0_1] : memref<2x3x256xf32, #tpu.memory_space<vmem>>, vector<2x3x256xf32>
    %cst = arith.constant dense<0.000000e+00> : vector<2x3xf32>
    %1 = vector.multi_reduction <add>, %0, %cst [2] : vector<2x3x256xf32> to vector<2x3xf32>
    %2 = vector.shape_cast %1 : vector<2x3xf32> to vector<2x3x1xf32>
    %cst_2 = arith.constant 3.906250e-03 : f32
    %3 = vector.broadcast %cst_2 : f32 to vector<2x3x1xf32>
    %4 = arith.mulf %2, %3 : vector<2x3x1xf32>
    %5 = vector.extract_strided_slice %4 {offsets = [0, 0, 0], sizes = [2, 1, 1], strides = [1, 1, 1]} : vector<2x3x1xf32> to vector<2x1x1xf32>
    %6 = vector.shape_cast %5 : vector<2x1x1xf32> to vector<2x1xf32>
    %c0_3 = arith.constant 0 : index
    %c0_4 = arith.constant 0 : index
    %7 = memref.load %arg2[%c0_3, %c0_4] : memref<3x3xf32, #tpu.memory_space<smem>>
    %8 = vector.broadcast %7 : f32 to vector<2x1xf32>
    %9 = arith.mulf %6, %8 : vector<2x1xf32>
    %10 = vector.extract_strided_slice %4 {offsets = [0, 1, 0], sizes = [2, 1, 1], strides = [1, 1, 1]} : vector<2x3x1xf32> to vector<2x1x1xf32>
    %11 = vector.shape_cast %10 : vector<2x1x1xf32> to vector<2x1xf32>
    %c0_5 = arith.constant 0 : index
    %c1 = arith.constant 1 : index
    %12 = memref.load %arg2[%c0_5, %c1] : memref<3x3xf32, #tpu.memory_space<smem>>
    %13 = vector.broadcast %12 : f32 to vector<2x1xf32>
    %14 = arith.mulf %11, %13 : vector<2x1xf32>
    %15 = arith.addf %9, %14 : vector<2x1xf32>
    %16 = vector.extract_strided_slice %4 {offsets = [0, 2, 0], sizes = [2, 1, 1], strides = [1, 1, 1]} : vector<2x3x1xf32> to vector<2x1x1xf32>
    %17 = vector.shape_cast %16 : vector<2x1x1xf32> to vector<2x1xf32>
    %c0_6 = arith.constant 0 : index
    %c2 = arith.constant 2 : index
    %18 = memref.load %arg2[%c0_6, %c2] : memref<3x3xf32, #tpu.memory_space<smem>>
    %19 = vector.broadcast %18 : f32 to vector<2x1xf32>
    %20 = arith.mulf %17, %19 : vector<2x1xf32>
    %21 = arith.addf %15, %20 : vector<2x1xf32>
    %cst_7 = arith.constant 0.000000e+00 : f32
    %22 = vector.broadcast %cst_7 : f32 to vector<2x1xf32>
    %23 = arith.maximumf %21, %22 : vector<2x1xf32>
    %24 = arith.negf %23 : vector<2x1xf32>
    %25 = math.exp %24 : vector<2x1xf32>
    %cst_8 = arith.constant 1.000000e+00 : f32
    %26 = vector.broadcast %cst_8 : f32 to vector<2x1xf32>
    %27 = arith.addf %26, %25 : vector<2x1xf32>
    %28 = arith.divf %26, %27 : vector<2x1xf32>
    %29 = vector.extract_strided_slice %0 {offsets = [0, 0, 0], sizes = [2, 1, 256], strides = [1, 1, 1]} : vector<2x3x256xf32> to vector<2x1x256xf32>
    %30 = vector.shape_cast %29 : vector<2x1x256xf32> to vector<2x256xf32>
    %31 = vector.broadcast %28 : vector<2x1xf32> to vector<2x256xf32>
    %32 = arith.mulf %30, %31 : vector<2x256xf32>
    %c0_9 = arith.constant 0 : index
    %c0_10 = arith.constant 0 : index
    %c0_11 = arith.constant 0 : index
    %33 = vector.load %arg3[%c0_9, %c0_10, %c0_11] : memref<2x3x256xf32, #tpu.memory_space<vmem>>, vector<2x1x256xf32>
    %34 = vector.shape_cast %33 : vector<2x1x256xf32> to vector<2x256xf32>
    %35 = vector.shape_cast %32 : vector<2x256xf32> to vector<2x1x256xf32>
    tpu.vector_store %arg3[%c0_9, %c0_10, %c0_11], %35 {strides = array<i32>} : memref<2x3x256xf32, #tpu.memory_space<vmem>>, vector<2x1x256xf32>,
    %36 = vector.extract_strided_slice %4 {offsets = [0, 0, 0], sizes = [2, 1, 1], strides = [1, 1, 1]} : vector<2x3x1xf32> to vector<2x1x1xf32>
    %37 = vector.shape_cast %36 : vector<2x1x1xf32> to vector<2x1xf32>
    %c1_12 = arith.constant 1 : index
    %c0_13 = arith.constant 0 : index
    %38 = memref.load %arg2[%c1_12, %c0_13] : memref<3x3xf32, #tpu.memory_space<smem>>
    %39 = vector.broadcast %38 : f32 to vector<2x1xf32>
    %40 = arith.mulf %37, %39 : vector<2x1xf32>
    %41 = vector.extract_strided_slice %4 {offsets = [0, 1, 0], sizes = [2, 1, 1], strides = [1, 1, 1]} : vector<2x3x1xf32> to vector<2x1x1xf32>
    %42 = vector.shape_cast %41 : vector<2x1x1xf32> to vector<2x1xf32>
    %c1_14 = arith.constant 1 : index
    %c1_15 = arith.constant 1 : index
    %43 = memref.load %arg2[%c1_14, %c1_15] : memref<3x3xf32, #tpu.memory_space<smem>>
    %44 = vector.broadcast %43 : f32 to vector<2x1xf32>
    %45 = arith.mulf %42, %44 : vector<2x1xf32>
    %46 = arith.addf %40, %45 : vector<2x1xf32>
    %47 = vector.extract_strided_slice %4 {offsets = [0, 2, 0], sizes = [2, 1, 1], strides = [1, 1, 1]} : vector<2x3x1xf32> to vector<2x1x1xf32>
    %48 = vector.shape_cast %47 : vector<2x1x1xf32> to vector<2x1xf32>
    %c1_16 = arith.constant 1 : index
    %c2_17 = arith.constant 2 : index
    %49 = memref.load %arg2[%c1_16, %c2_17] : memref<3x3xf32, #tpu.memory_space<smem>>
    %50 = vector.broadcast %49 : f32 to vector<2x1xf32>
    %51 = arith.mulf %48, %50 : vector<2x1xf32>
    %52 = arith.addf %46, %51 : vector<2x1xf32>
    %cst_18 = arith.constant 0.000000e+00 : f32
    %53 = vector.broadcast %cst_18 : f32 to vector<2x1xf32>
    %54 = arith.maximumf %52, %53 : vector<2x1xf32>
    %55 = arith.negf %54 : vector<2x1xf32>
    %56 = math.exp %55 : vector<2x1xf32>
    %cst_19 = arith.constant 1.000000e+00 : f32
    %57 = vector.broadcast %cst_19 : f32 to vector<2x1xf32>
    %58 = arith.addf %57, %56 : vector<2x1xf32>
    %59 = arith.divf %57, %58 : vector<2x1xf32>
    %60 = vector.extract_strided_slice %0 {offsets = [0, 1, 0], sizes = [2, 1, 256], strides = [1, 1, 1]} : vector<2x3x256xf32> to vector<2x1x256xf32>
    %61 = vector.shape_cast %60 : vector<2x1x256xf32> to vector<2x256xf32>
    %62 = vector.broadcast %59 : vector<2x1xf32> to vector<2x256xf32>
    %63 = arith.mulf %61, %62 : vector<2x256xf32>
    %c0_20 = arith.constant 0 : index
    %c1_21 = arith.constant 1 : index
    %c0_22 = arith.constant 0 : index
    %64 = vector.load %arg3[%c0_20, %c1_21, %c0_22] : memref<2x3x256xf32, #tpu.memory_space<vmem>>, vector<2x1x256xf32>
    %65 = vector.shape_cast %64 : vector<2x1x256xf32> to vector<2x256xf32>
    %66 = vector.shape_cast %63 : vector<2x256xf32> to vector<2x1x256xf32>
    tpu.vector_store %arg3[%c0_20, %c1_21, %c0_22], %66 {strides = array<i32>} : memref<2x3x256xf32, #tpu.memory_space<vmem>>, vector<2x1x256xf32>,
    %67 = vector.extract_strided_slice %4 {offsets = [0, 0, 0], sizes = [2, 1, 1], strides = [1, 1, 1]} : vector<2x3x1xf32> to vector<2x1x1xf32>
    %68 = vector.shape_cast %67 : vector<2x1x1xf32> to vector<2x1xf32>
    %c2_23 = arith.constant 2 : index
    %c0_24 = arith.constant 0 : index
    %69 = memref.load %arg2[%c2_23, %c0_24] : memref<3x3xf32, #tpu.memory_space<smem>>
    %70 = vector.broadcast %69 : f32 to vector<2x1xf32>
    %71 = arith.mulf %68, %70 : vector<2x1xf32>
    %72 = vector.extract_strided_slice %4 {offsets = [0, 1, 0], sizes = [2, 1, 1], strides = [1, 1, 1]} : vector<2x3x1xf32> to vector<2x1x1xf32>
    %73 = vector.shape_cast %72 : vector<2x1x1xf32> to vector<2x1xf32>
    %c2_25 = arith.constant 2 : index
    %c1_26 = arith.constant 1 : index
    %74 = memref.load %arg2[%c2_25, %c1_26] : memref<3x3xf32, #tpu.memory_space<smem>>
    %75 = vector.broadcast %74 : f32 to vector<2x1xf32>
    %76 = arith.mulf %73, %75 : vector<2x1xf32>
    %77 = arith.addf %71, %76 : vector<2x1xf32>
    %78 = vector.extract_strided_slice %4 {offsets = [0, 2, 0], sizes = [2, 1, 1], strides = [1, 1, 1]} : vector<2x3x1xf32> to vector<2x1x1xf32>
    %79 = vector.shape_cast %78 : vector<2x1x1xf32> to vector<2x1xf32>
    %c2_27 = arith.constant 2 : index
    %c2_28 = arith.constant 2 : index
    %80 = memref.load %arg2[%c2_27, %c2_28] : memref<3x3xf32, #tpu.memory_space<smem>>
    %81 = vector.broadcast %80 : f32 to vector<2x1xf32>
    %82 = arith.mulf %79, %81 : vector<2x1xf32>
    %83 = arith.addf %77, %82 : vector<2x1xf32>
    %cst_29 = arith.constant 0.000000e+00 : f32
    %84 = vector.broadcast %cst_29 : f32 to vector<2x1xf32>
    %85 = arith.maximumf %83, %84 : vector<2x1xf32>
    %86 = arith.negf %85 : vector<2x1xf32>
    %87 = math.exp %86 : vector<2x1xf32>
    %cst_30 = arith.constant 1.000000e+00 : f32
    %88 = vector.broadcast %cst_30 : f32 to vector<2x1xf32>
    %89 = arith.addf %88, %87 : vector<2x1xf32>
    %90 = arith.divf %88, %89 : vector<2x1xf32>
    %91 = vector.extract_strided_slice %0 {offsets = [0, 2, 0], sizes = [2, 1, 256], strides = [1, 1, 1]} : vector<2x3x256xf32> to vector<2x1x256xf32>
    %92 = vector.shape_cast %91 : vector<2x1x256xf32> to vector<2x256xf32>
    %93 = vector.broadcast %90 : vector<2x1xf32> to vector<2x256xf32>
    %94 = arith.mulf %92, %93 : vector<2x256xf32>
    %c0_31 = arith.constant 0 : index
    %c2_32 = arith.constant 2 : index
    %c0_33 = arith.constant 0 : index
    %95 = vector.load %arg3[%c0_31, %c2_32, %c0_33] : memref<2x3x256xf32, #tpu.memory_space<vmem>>, vector<2x1x256xf32>
    %96 = vector.shape_cast %95 : vector<2x1x256xf32> to vector<2x256xf32>
    %97 = vector.shape_cast %94 : vector<2x256xf32> to vector<2x1x256xf32>
    tpu.vector_store %arg3[%c0_31, %c2_32, %c0_33], %97 {strides = array<i32>} : memref<2x3x256xf32, #tpu.memory_space<vmem>>, vector<2x1x256xf32>,
    return
  }
  func.func @transform_0(%arg0: i32) -> (i32, i32, i32) {
    %c0_i32 = arith.constant 0 : i32
    %c0_i32_0 = arith.constant 0 : i32
    %c0_i32_1 = arith.constant 0 : i32
    return %arg0, %c0_i32, %c0_i32_0 : i32, i32, i32
  }
  func.func @transform_1(%arg0: i32) -> (i32, i32) {
    %c0_i32 = arith.constant 0 : i32
    %c0_i32_0 = arith.constant 0 : i32
    %c0_i32_1 = arith.constant 0 : i32
    return %c0_i32, %c0_i32_0 : i32, i32
  }
  func.func @transform_2(%arg0: i32) -> (i32, i32, i32) {
    %c0_i32 = arith.constant 0 : i32
    %c0_i32_0 = arith.constant 0 : i32
    %c0_i32_1 = arith.constant 0 : i32
    return %arg0, %c0_i32, %c0_i32_0 : i32, i32, i32
  }
}

</mosaic_0001>

<llo_original>
// kernel: channel_weight_forward.1
$region0: #{channel_weight_forward.1}
  #allocation0 [shape = 'u32[]', space=smem, size = 0x4, offset = 0x4, fixed_abs, tag = 'smem constant byte address 0x4 - core index']
  #allocation1 [shape = 'u32[72,128]{1,0:T(1,128)}', space=vmem, size = 0x9000, scoped, tag = 'internal scratch']
  %s0 = inlined_call_operand.vmem [shape: f32[2,3,256], index: 0, kind: input, shape index: {}]
  %s1 = inlined_call_operand.vmem [shape: f32[3,3], index: 1, kind: input, shape index: {}]
  %s2 = inlined_call_operand.vmem [shape: f32[2,3,256], index: 2, kind: output, shape index: {}]
  %s3 = sld [smem:[#allocation0]]
  $region22: #{channel_weight_forward.1} parent=0
    _
  %s5 = ssub.s32 1, %s3
  %s6 = scalar_select 0, %s5, %s3
  $region1: #{channel_weight_forward.1} parent=0
    #allocation2 [shape = 'u8[2048]{0}', space=smem, size = 0x800, scoped, tag = 'input window, operand 1, single buffered']
    #allocation3 [shape = 's32[1]{0}', space=sflag, size = 0x4, scoped, tag = 'scoped memory for channel_weight_forward.1']
    %7 = vsyncpa [#allocation3], 0
    // Predicated region
    $region2: #{channel_weight_forward.1} parent=1 // pred_check
      _
    $region3: #{channel_weight_forward.1} parent=1 // pred_check_branch
      %9 = sbr.rel (0) target = $region5
    $region4: #{channel_weight_forward.1} parent=1 // pred_region
      _
    $region5: #{channel_weight_forward.1} parent=1 // pred_fallthru
      _
    // Predicated region
    $region6: #{channel_weight_forward.1} parent=1 // pred_check
      _
    $region7: #{channel_weight_forward.1} parent=1 // pred_check_branch
      %11 = sbr.rel (0) target = $region9
    $region8: #{channel_weight_forward.1} parent=1 // pred_region
      %13 = vsyncadd [#allocation3], 0
      %s15 = sshll.u32 %s1, 4
      %s16 = int_to_ptr.vmem [resolvable:$true] %s15
      %18 = dma.vmem_to_smem %s16, 64, [#allocation2], [#allocation3]
    $region9: #{channel_weight_forward.1} parent=1 // pred_fallthru
      _
    // Predicated region
    $region10: #{channel_weight_forward.1} parent=1 // pred_check
      _
    $region11: #{channel_weight_forward.1} parent=1 // pred_check_branch
      %20 = sbr.rel (0) target = $region13
    $region12: #{channel_weight_forward.1} parent=1 // pred_region
      %22 = dma.done [#allocation3], 64
    $region13: #{channel_weight_forward.1} parent=1 // pred_fallthru
      _
    %23 = sfence
    %v24 = vld [vmem:[%s0] sm:$0x77]
    %v25 = vld [vmem:[%s0 + $0x8] sm:$0x77]
    %28 = vst [vmem:[#allocation1] ss:$2 sm:$0xff] %v24
    %v29 = vld.sshfl [vmem:[#allocation1] sm:$0xff pattern:$0x75316420]
    %v30 = vld.sshfl [vmem:[#allocation1 + $0x8] sm:$0xff pattern:$0x75316420]
    %s31 = scalar_lea.vmem [#allocation1], 16
    %32 = vst [vmem:[%s31] ss:$2 sm:$0xff] %v25
    %v33 = vld.sshfl [vmem:[#allocation1 + $0x10] sm:$0xff pattern:$0x75316420]
    %v34 = vld.sshfl [vmem:[#allocation1 + $0x18] sm:$0xff pattern:$0x75316420]
    %vm39 = vcmask 1042432
    %v40 = vsel %vm39, %v29, 0.0
    %v41 = vsel %vm39, %v30, 0.0
    %v42 = vadd.f32 %v40, %v41
    %43 = vadd.xlane.f32.xlu0 %v42
    %v44 = vpop.xlane.xlu0 %43
    %v45 = vsel %vm39, %v33, 0.0
    %v46 = vsel %vm39, %v34, 0.0
    %v47 = vadd.f32 %v45, %v46
    %48 = vadd.xlane.f32.xlu0 %v47
    %v49 = vpop.xlane.xlu0 %48
    %v50 = vmul.f32 %v44, 0.00390625
    %v51 = vmul.f32 %v49, 0.00390625
    %s52 = sld [smem:[#allocation2]]
    %v53 = vstv %s52
    %v54 = vmul.f32 %v50, %v53
    %v55 = vmul.f32 %v51, %v53
    %s56 = sld [smem:[#allocation2 + $0x1]]
    %v57 = vstv %s56
    %v58 = vmul.f32 %v50, %v57
    %v59 = vmul.f32 %v51, %v57
    %v62 = vrot.slane %v58, 1
    %v63 = vrot.slane %v59, 1
    %v66 = vadd.f32 %v54, %v62
    %v67 = vadd.f32 %v55, %v63
    %s68 = sld [smem:[#allocation2 + $0x2]]
    %v69 = vstv %s68
    %v70 = vmul.f32 %v50, %v69
    %v71 = vmul.f32 %v51, %v69
    %v74 = vrot.slane %v70, 2
    %v75 = vrot.slane %v71, 2
    %v78 = vadd.f32 %v66, %v74
    %v79 = vadd.f32 %v67, %v75
    %v80 = vmax.f32 %v78, 0.0
    %v81 = vmax.f32 %v79, 0.0
    %v82 = vxor.u32 %v80, 2147483648
    %v83 = vxor.u32 %v81, 2147483648
    %v84 = vmul.f32 %v82, 1.442695
    %v85 = vpow.pop %v84
    %v86 = vmul.f32 %v83, 1.442695
    %v87 = vpow.pop %v86
    %v88 = vadd.f32 %v85, 1.0
    %v89 = vadd.f32 %v87, 1.0
    %v90 = vrcp.pop %v88
    %v91 = vmul.f32 %v88, %v90
    %v92 = vsub.f32 1.0, %v91
    %v93 = vmul.f32 %v90, %v92
    %v94 = vadd.f32 %v90, %v93
    %vm95 = vweird.f32 %v88
    %vm96 = vweird.f32 %v90
    %vm97 = vmor %vm95, %vm96
    %v98 = vsel %vm97, %v90, %v94
    %v99 = vand.u32 2147483647, %v88
    %vm100 = vcmp.eq.f32.partialorder %v99, 8.507059e+37
    %v101 = vand.u32 %v88, 2147483648
    %v102 = vor.u32 1.1754944e-38, %v101
    %v103 = vsel %vm100, %v102, %v98
    %v104 = vmul.f32 1.0, %v103
    %v105 = vrcp.pop %v89
    %v106 = vmul.f32 %v89, %v105
    %v107 = vsub.f32 1.0, %v106
    %v108 = vmul.f32 %v105, %v107
    %v109 = vadd.f32 %v105, %v108
    %vm110 = vweird.f32 %v89
    %vm111 = vweird.f32 %v105
    %vm112 = vmor %vm110, %vm111
    %v113 = vsel %vm112, %v105, %v109
    %v114 = vand.u32 2147483647, %v89
    %vm115 = vcmp.eq.f32.partialorder %v114, 8.507059e+37
    %v116 = vand.u32 %v89, 2147483648
    %v117 = vor.u32 1.1754944e-38, %v116
    %v118 = vsel %vm115, %v117, %v113
    %v119 = vmul.f32 1.0, %v118
    %121 = vset.pattern.permute.xlu0 0
    %122 = vperm.xlu0 %121, %v104
    %v123 = vpop.permute.xlu0 %122
    %125 = vset.pattern.permute.xlu0 0
    %126 = vperm.xlu0 %125, %v119
    %v127 = vpop.permute.xlu0 %126
    %v129 = vunpack.c.l.s4 839922192
    %v130 = vunpack.c.0.s8 %v129
    %v131 = vperm.slane %v123, %v130
    %v133 = vunpack.c.l.s4 839922192
    %v134 = vunpack.c.0.s8 %v133
    %v135 = vperm.slane %v127, %v134
    %v138 = vmul.f32 %v24, %v131
    %v139 = vmul.f32 %v25, %v135
    %v142 = vrot.slane %v138, 3
    %v143 = vrot.slane %v139, 3
    %vm144 = vcmask 1040384
    %v145 = vsel %vm144, %v138, %v142
    %v146 = vsel %vm144, %v139, %v143
    %v149 = vlaneseq
    %vm150 = vcmp.ge.s32.totalorder %v149, 0
    %vm151 = vcmp.lt.s32.totalorder %v149, 256
    %vm152 = vmand %vm150, %vm151
    %153 = vst.msk [vmem:[%s2] ss:$4 sm:$0x3] %vm152, %v145
    %s154 = scalar_lea.vmem %s2, 8
    %155 = vst.msk [vmem:[%s154] ss:$4 sm:$0x3] %vm152, %v146
    %s156 = sld [smem:[#allocation2 + $0x80]]
    %v157 = vstv %s156
    %v158 = vmul.f32 %v50, %v157
    %v159 = vmul.f32 %v51, %v157
    %s160 = sld [smem:[#allocation2 + $0x81]]
    %v161 = vstv %s160
    %v162 = vmul.f32 %v50, %v161
    %v163 = vmul.f32 %v51, %v161
    %v166 = vrot.slane %v162, 1
    %v167 = vrot.slane %v163, 1
    %v170 = vadd.f32 %v158, %v166
    %v171 = vadd.f32 %v159, %v167
    %s172 = sld [smem:[#allocation2 + $0x82]]
    %v173 = vstv %s172
    %v174 = vmul.f32 %v50, %v173
    %v175 = vmul.f32 %v51, %v173
    %v178 = vrot.slane %v174, 2
    %v179 = vrot.slane %v175, 2
    %v182 = vadd.f32 %v170, %v178
    %v183 = vadd.f32 %v171, %v179
    %v184 = vmax.f32 %v182, 0.0
    %v185 = vmax.f32 %v183, 0.0
    %v186 = vxor.u32 %v184, 2147483648
    %v187 = vxor.u32 %v185, 2147483648
    %v188 = vmul.f32 %v186, 1.442695
    %v189 = vpow.pop %v188
    %v190 = vmul.f32 %v187, 1.442695
    %v191 = vpow.pop %v190
    %v192 = vadd.f32 %v189, 1.0
    %v193 = vadd.f32 %v191, 1.0
    %v194 = vrcp.pop %v192
    %v195 = vmul.f32 %v192, %v194
    %v196 = vsub.f32 1.0, %v195
    %v197 = vmul.f32 %v194, %v196
    %v198 = vadd.f32 %v194, %v197
    %vm199 = vweird.f32 %v192
    %vm200 = vweird.f32 %v194
    %vm201 = vmor %vm199, %vm200
    %v202 = vsel %vm201, %v194, %v198
    %v203 = vand.u32 2147483647, %v192
    %vm204 = vcmp.eq.f32.partialorder %v203, 8.507059e+37
    %v205 = vand.u32 %v192, 2147483648
    %v206 = vor.u32 1.1754944e-38, %v205
    %v207 = vsel %vm204, %v206, %v202
    %v208 = vmul.f32 1.0, %v207
    %v209 = vrcp.pop %v193
    %v210 = vmul.f32 %v193, %v209
    %v211 = vsub.f32 1.0, %v210
    %v212 = vmul.f32 %v209, %v211
    %v213 = vadd.f32 %v209, %v212
    %vm214 = vweird.f32 %v193
    %vm215 = vweird.f32 %v209
    %vm216 = vmor %vm214, %vm215
    %v217 = vsel %vm216, %v209, %v213
    %v218 = vand.u32 2147483647, %v193
    %vm219 = vcmp.eq.f32.partialorder %v218, 8.507059e+37
    %v220 = vand.u32 %v193, 2147483648
    %v221 = vor.u32 1.1754944e-38, %v220
    %v222 = vsel %vm219, %v221, %v217
    %v223 = vmul.f32 1.0, %v222
    %225 = vset.pattern.permute.xlu0 0
    %226 = vperm.xlu0 %225, %v208
    %v227 = vpop.permute.xlu0 %226
    %229 = vset.pattern.permute.xlu0 0
    %230 = vperm.xlu0 %229, %v223
    %v231 = vpop.permute.xlu0 %230
    %v233 = vunpack.c.l.s4 839922192
    %v234 = vunpack.c.0.s8 %v233
    %v235 = vperm.slane %v227, %v234
    %v237 = vunpack.c.l.s4 839922192
    %v238 = vunpack.c.0.s8 %v237
    %v239 = vperm.slane %v231, %v238
    %v240 = vrot.slane %v235, 7
    %v241 = vrot.slane %v239, 7
    %v244 = vmul.f32 %v24, %v240
    %v245 = vmul.f32 %v25, %v241
    %248 = vst [vmem:[#allocation1] sm:$0xff] %v244
    %s249 = scalar_lea.vmem [#allocation1], 1
    %v250 = vld [vmem:[%s249] ss:$4 sm:$0xff]
    %251 = vst [vmem:[#allocation1 + $0x20] sm:$0xff] %v245
    %s252 = scalar_lea.vmem [#allocation1], 33
    %v253 = vld [vmem:[%s252] ss:$4 sm:$0xff]
    %s256 = scalar_lea.vmem %s2, 1
    %257 = vst.msk [vmem:[%s256] ss:$4 sm:$0x3] %vm152, %v250
    %s258 = scalar_lea.vmem %s2, 9
    %259 = vst.msk [vmem:[%s258] ss:$4 sm:$0x3] %vm152, %v253
    %s260 = sld [smem:[#allocation2 + $0x100]]
    %v261 = vstv %s260
    %v262 = vmul.f32 %v50, %v261
    %v263 = vmul.f32 %v51, %v261
    %s264 = sld [smem:[#allocation2 + $0x101]]
    %v265 = vstv %s264
    %v266 = vmul.f32 %v50, %v265
    %v267 = vmul.f32 %v51, %v265
    %v270 = vrot.slane %v266, 1
    %v271 = vrot.slane %v267, 1
    %v274 = vadd.f32 %v262, %v270
    %v275 = vadd.f32 %v263, %v271
    %s276 = sld [smem:[#allocation2 + $0x102]]
    %v277 = vstv %s276
    %v278 = vmul.f32 %v50, %v277
    %v279 = vmul.f32 %v51, %v277
    %v282 = vrot.slane %v278, 2
    %v283 = vrot.slane %v279, 2
    %v286 = vadd.f32 %v274, %v282
    %v287 = vadd.f32 %v275, %v283
    %v288 = vmax.f32 %v286, 0.0
    %v289 = vmax.f32 %v287, 0.0
    %v290 = vxor.u32 %v288, 2147483648
    %v291 = vxor.u32 %v289, 2147483648
    %v292 = vmul.f32 %v290, 1.442695
    %v293 = vpow.pop %v292
    %v294 = vmul.f32 %v291, 1.442695
    %v295 = vpow.pop %v294
    %v296 = vadd.f32 %v293, 1.0
    %v297 = vadd.f32 %v295, 1.0
    %v298 = vrcp.pop %v296
    %v299 = vmul.f32 %v296, %v298
    %v300 = vsub.f32 1.0, %v299
    %v301 = vmul.f32 %v298, %v300
    %v302 = vadd.f32 %v298, %v301
    %vm303 = vweird.f32 %v296
    %vm304 = vweird.f32 %v298
    %vm305 = vmor %vm303, %vm304
    %v306 = vsel %vm305, %v298, %v302
    %v307 = vand.u32 2147483647, %v296
    %vm308 = vcmp.eq.f32.partialorder %v307, 8.507059e+37
    %v309 = vand.u32 %v296, 2147483648
    %v310 = vor.u32 1.1754944e-38, %v309
    %v311 = vsel %vm308, %v310, %v306
    %v312 = vmul.f32 1.0, %v311
    %v313 = vrcp.pop %v297
    %v314 = vmul.f32 %v297, %v313
    %v315 = vsub.f32 1.0, %v314
    %v316 = vmul.f32 %v313, %v315
    %v317 = vadd.f32 %v313, %v316
    %vm318 = vweird.f32 %v297
    %vm319 = vweird.f32 %v313
    %vm320 = vmor %vm318, %vm319
    %v321 = vsel %vm320, %v313, %v317
    %v322 = vand.u32 2147483647, %v297
    %vm323 = vcmp.eq.f32.partialorder %v322, 8.507059e+37
    %v324 = vand.u32 %v297, 2147483648
    %v325 = vor.u32 1.1754944e-38, %v324
    %v326 = vsel %vm323, %v325, %v321
    %v327 = vmul.f32 1.0, %v326
    %329 = vset.pattern.permute.xlu0 0
    %330 = vperm.xlu0 %329, %v312
    %v331 = vpop.permute.xlu0 %330
    %333 = vset.pattern.permute.xlu0 0
    %334 = vperm.xlu0 %333, %v327
    %v335 = vpop.permute.xlu0 %334
    %v337 = vunpack.c.l.s4 839922192
    %v338 = vunpack.c.0.s8 %v337
    %v339 = vperm.slane %v331, %v338
    %v341 = vunpack.c.l.s4 839922192
    %v342 = vunpack.c.0.s8 %v341
    %v343 = vperm.slane %v335, %v342
    %v344 = vrot.slane %v339, 6
    %v345 = vrot.slane %v343, 6
    %v348 = vmul.f32 %v24, %v344
    %v349 = vmul.f32 %v25, %v345
    %352 = vst [vmem:[#allocation1] sm:$0xff] %v348
    %s353 = scalar_lea.vmem [#allocation1], 2
    %v354 = vld [vmem:[%s353] ss:$4 sm:$0xff]
    %355 = vst [vmem:[#allocation1 + $0x20] sm:$0xff] %v349
    %s356 = scalar_lea.vmem [#allocation1], 34
    %v357 = vld [vmem:[%s356] ss:$4 sm:$0xff]
    %s360 = scalar_lea.vmem %s2, 2
    %361 = vst.msk [vmem:[%s360] ss:$4 sm:$0x3] %vm152, %v354
    %s362 = scalar_lea.vmem %s2, 10
    %363 = vst.msk [vmem:[%s362] ss:$4 sm:$0x3] %vm152, %v357
    // Predicated region
    $region14: #{channel_weight_forward.1} parent=1 // pred_check
      _
    $region15: #{channel_weight_forward.1} parent=1 // pred_check_branch
      %365 = sbr.rel (0) target = $region17
    $region16: #{channel_weight_forward.1} parent=1 // pred_region
      _
    $region17: #{channel_weight_forward.1} parent=1 // pred_fallthru
      _
    // Predicated region
    $region18: #{channel_weight_forward.1} parent=1 // pred_check
      _
    $region19: #{channel_weight_forward.1} parent=1 // pred_check_branch
      %367 = sbr.rel (0) target = $region21
    $region20: #{channel_weight_forward.1} parent=1 // pred_region
      _
    $region21: #{channel_weight_forward.1} parent=1 // pred_fallthru
      _
    %368 = vsyncpa [#allocation3], 1

</llo_original>
